<compile_context>
chip_gen: v7x
topology: tpu7x:2x2x1
jax: 0.10.0
libtpu: 0.0.40
codegen_flags: <defaults>
</compile_context>

<pallas_src>
import functools

import numpy as np
import jax
import jax.numpy as jnp
from jax import lax
from jax.experimental import pallas as pl
from jax.experimental.pallas import tpu as pltpu


def _vmem_capacity_bytes() -> int:
    """Physical VMEM per TensorCore; conservative 64 MiB (v7x) if undetectable."""
    try:
        info = pltpu.get_tpu_info()
        cap = int(getattr(info, "vmem_capacity_bytes", 0) or 0)
        if cap > 0:
            return cap
    except Exception:
        pass
    return 64 * 1024 * 1024


def _num_tensorcores() -> int:
    """TensorCores addressable by one pallas_call (2 on v7x, 1 on v5e/v6e)."""
    try:
        dev = jax.devices()[0]
        n = getattr(dev, "num_cores", None)
        if n:
            return int(n)
        kind = str(getattr(dev, "device_kind", "")).lower()
        if "v7" in kind:
            return 2
    except Exception:
        pass
    return 1


def _round_up(v: int, m: int) -> int:
    return -(-v // m) * m


def _cdiv(a: int, b: int) -> int:
    return -(-a // b)


def _topk_relu_kernel(x_ref, o_ref, *, k: int):
    """Keep relu(x) where x >= (k-th largest value of its row), zero elsewhere."""
    x = x_ref[...]
    if jnp.issubdtype(x.dtype, jnp.floating):
        neg = jnp.array(-jnp.inf, dtype=x.dtype)
    else:
        neg = jnp.array(jnp.iinfo(x.dtype).min, dtype=x.dtype)

    # Walk distinct values in descending order (native dtype: max/compare are exact).
    # `rem` tracks how many of the k slots are still unfilled; the threshold stops
    # updating once the budget is exhausted, yielding the true k-th largest value.
    # TODO(synk): for large k (>=16) a count-based bisection over the value range would
    # cut this from k linear passes to O(log) passes (main lever on v7x).
    work = x
    thr = None
    rem = None
    for i in range(k):                      # k is small & static -> unrolled
        m = jnp.max(work, axis=-1, keepdims=True)
        hit = work >= m                     # copies of the current max (among remaining)
        cnt = jnp.sum(hit.astype(jnp.float32), axis=-1, keepdims=True)
        if i == 0:
            thr = m
            rem = jnp.float32(k) - cnt
        else:
            thr = jnp.where(rem > 0, m, thr)
            rem = rem - cnt
        if i + 1 < k:
            work = jnp.where(hit, neg, work)

    relu_x = jnp.maximum(x, jnp.zeros_like(x))
    o_ref[...] = jnp.where(x >= thr, relu_x, jnp.zeros_like(relu_x)).astype(o_ref.dtype)


def topk_relu(x: jax.Array, k: int) -> jax.Array:
    """TopK(k) + ReLU + scatter-back along the last dim. Output dtype == input dtype."""
    orig_shape = x.shape
    d = int(orig_shape[-1])
    if k <= 0:
        return jnp.zeros_like(x)
    k = min(int(k), d)  # TODO(synk): torch.topk raises when k > D; we clamp instead.

    rows = 1
    for s in orig_shape[:-1]:
        rows *= int(s)
    x2 = x.reshape(rows, d)

    isize = jnp.dtype(x.dtype).itemsize
    sub = max(8, 32 // isize)               # sublane multiple: 8 f32, 16 bf16, 32 int8

    cap = _vmem_capacity_bytes()
    tile_budget = max(8 << 20, min(48 << 20, (cap * 3) // 8))  # 48MiB @128MiB, 24MiB @64MiB
    vmem_limit = (cap * 3) // 4                                 # 96MiB @128MiB, 48MiB @64MiB

    # live bytes / element: double-buffered in+out (native dtype) + ~3 in-kernel temps
    per_elem = 7 * isize + 4
    rows_fit = tile_budget // (per_elem * d)
    if rows_fit >= rows:
        tile = rows
    else:
        # TODO(synk): if even `sub` rows x d exceed the budget (huge d), a second
        # 'arbitrary' grid axis over d with a carried per-row threshold is needed.
        tile = max(sub, (rows_fit // sub) * sub)

    ncores = _num_tensorcores()
    if ncores >= 2 and rows > sub:
        # >= 2*ncores roughly-equal grid steps so every TensorCore gets balanced work.
        target_steps = 2 * ncores
        if _cdiv(rows, tile) < target_steps:
            want = min(target_steps, _cdiv(rows, sub))
            tile = min(tile, max(sub, _round_up(_cdiv(rows, want), sub)))

    steps = _cdiv(rows, tile)
    if ncores >= 2 and steps >= ncores:
        row_sem = getattr(pltpu, "CORE_PARALLEL", pltpu.PARALLEL)
    else:
        row_sem = pltpu.PARALLEL

    out2 = pl.pallas_call(
        functools.partial(_topk_relu_kernel, k=k),
        out_shape=jax.ShapeDtypeStruct((rows, d), x.dtype),
        grid_spec=pltpu.PrefetchScalarGridSpec(
            num_scalar_prefetch=0,
            grid=(steps,),
            in_specs=[pl.BlockSpec((tile, d), lambda i: (i, 0))],
            out_specs=pl.BlockSpec((tile, d), lambda i: (i, 0)),
        ),
        compiler_params=pltpu.CompilerParams(
            dimension_semantics=(row_sem,),
            vmem_limit_bytes=int(vmem_limit),
        ),
    )(x2)
    return out2.reshape(orig_shape)


def _topk_relu_ref(x: jax.Array, k: int) -> jax.Array:
    """Pure-JAX reference matching the PyTorch module (exact-k, index tie-break)."""
    vals, idx = lax.top_k(x, k)
    vals = jnp.maximum(vals, 0)
    flat_zeros = jnp.zeros_like(x).reshape(-1, x.shape[-1])
    flat_idx = idx.reshape(-1, k)
    flat_vals = vals.reshape(-1, k)
    row = jnp.arange(flat_zeros.shape[0])[:, None]
    res = flat_zeros.at[row, flat_idx].set(flat_vals)
    return res.reshape(x.shape)


if __name__ == "__main__":
    key = jax.random.PRNGKey(0)
    k1, k2, k3 = jax.random.split(key, 3)

    # Case 1: small feature dim (D=32 < 128): unified layout, masked lane stores.
    x_small = jax.random.normal(k1, (2, 4, 32), dtype=jnp.float32)
    out_small = jax.block_until_ready(topk_relu(x_small, 4))
    np.testing.assert_allclose(np.asarray(out_small),
                               np.asarray(_topk_relu_ref(x_small, 4)),
                               rtol=1e-6, atol=1e-6)

    # Case 2: D=128 with a ragged row count (rows=18).
    x_wide = jax.random.normal(k2, (2, 9, 128), dtype=jnp.float32)
    out_wide = jax.block_until_ready(topk_relu(x_wide, 5))
    np.testing.assert_allclose(np.asarray(out_wide),
                               np.asarray(_topk_relu_ref(x_wide, 5)),
                               rtol=1e-6, atol=1e-6)

    # Case 3: bf16, distinct integer values by construction (selection is exact in native dtype).
    noise = jax.random.normal(k3, (2, 8, 256), dtype=jnp.float32)
    order = jnp.argsort(noise, axis=-1)                      # random perm of 0..255 per row
    x_bf16 = (order.astype(jnp.float32) - 128.0).astype(jnp.bfloat16)
    out_bf16 = jax.block_until_ready(topk_relu(x_bf16, 7))
    np.testing.assert_allclose(np.asarray(out_bf16, dtype=np.float32),
                               np.asarray(_topk_relu_ref(x_bf16, 7), dtype=np.float32),
                               rtol=0, atol=0)

    # Case 4: duplicates below the cut (regression test for the old threshold bug):
    # rows start [5, 5, 3, 2, ...]; k=2 must keep only the two 5s.
    row = jnp.concatenate([jnp.array([5.0, 5.0, 3.0, 2.0], dtype=jnp.float32),
                           -jnp.arange(1.0, 125.0, dtype=jnp.float32)])
    x_dup = jnp.tile(row[None, :], (8, 1))
    out_dup = jax.block_until_ready(topk_relu(x_dup, 2))
    np.testing.assert_allclose(np.asarray(out_dup),
                               np.asarray(_topk_relu_ref(x_dup, 2)),
                               rtol=0, atol=0)

    print("KERNEL_OK")
</pallas_src>

<mosaic_0001>
module attributes {stable_mosaic.version = 11 : i64} {
  func.func @_topk_relu_kernel(%arg0: i32, %arg1: memref<8x32xf32, #tpu.memory_space<vmem>>, %arg2: memref<8x32xf32, #tpu.memory_space<vmem>>) attributes {dimension_semantics = [#tpu.dimension_semantics<parallel>], iteration_bounds = array<i64: 1>, scalar_prefetch = 0 : i64, scratch_operands = 0 : i64, tpu.core_type = #tpu.core_type<tc>, window_params = [{transform_indices = @transform_0, window_bounds = array<i64: 8, 32>}, {transform_indices = @transform_1, window_bounds = array<i64: 8, 32>}]} {
    %c0 = arith.constant 0 : index
    %c0_0 = arith.constant 0 : index
    %0 = vector.load %arg1[%c0, %c0_0] : memref<8x32xf32, #tpu.memory_space<vmem>>, vector<8x32xf32>
    %cst = arith.constant dense<0xFF800000> : vector<8xf32>
    %1 = vector.multi_reduction <maximumf>, %0, %cst [1] : vector<8x32xf32> to vector<8xf32>
    %2 = vector.shape_cast %1 : vector<8xf32> to vector<8x1xf32>
    %3 = vector.broadcast %2 : vector<8x1xf32> to vector<8x32xf32>
    %4 = arith.cmpf oge, %0, %3 : vector<8x32xf32>
    %5 = arith.extui %4 : vector<8x32xi1> to vector<8x32xi32>
    %6 = arith.sitofp %5 : vector<8x32xi32> to vector<8x32xf32>
    %cst_1 = arith.constant dense<0.000000e+00> : vector<8xf32>
    %7 = vector.multi_reduction <add>, %6, %cst_1 [1] : vector<8x32xf32> to vector<8xf32>
    %8 = vector.shape_cast %7 : vector<8xf32> to vector<8x1xf32>
    %cst_2 = arith.constant 4.000000e+00 : f32
    %9 = vector.broadcast %cst_2 : f32 to vector<8x1xf32>
    %10 = arith.subf %9, %8 : vector<8x1xf32>
    %cst_3 = arith.constant 0xFF800000 : f32
    %11 = vector.broadcast %cst_3 : f32 to vector<8x32xf32>
    %12 = arith.select %4, %11, %0 : vector<8x32xi1>, vector<8x32xf32>
    %cst_4 = arith.constant dense<0xFF800000> : vector<8xf32>
    %13 = vector.multi_reduction <maximumf>, %12, %cst_4 [1] : vector<8x32xf32> to vector<8xf32>
    %14 = vector.shape_cast %13 : vector<8xf32> to vector<8x1xf32>
    %15 = vector.broadcast %14 : vector<8x1xf32> to vector<8x32xf32>
    %16 = arith.cmpf oge, %12, %15 : vector<8x32xf32>
    %17 = arith.extui %16 : vector<8x32xi1> to vector<8x32xi32>
    %18 = arith.sitofp %17 : vector<8x32xi32> to vector<8x32xf32>
    %cst_5 = arith.constant dense<0.000000e+00> : vector<8xf32>
    %19 = vector.multi_reduction <add>, %18, %cst_5 [1] : vector<8x32xf32> to vector<8xf32>
    %20 = vector.shape_cast %19 : vector<8xf32> to vector<8x1xf32>
    %cst_6 = arith.constant 0.000000e+00 : f32
    %21 = vector.broadcast %cst_6 : f32 to vector<8x1xf32>
    %22 = arith.cmpf ogt, %10, %21 : vector<8x1xf32>
    %23 = arith.select %22, %14, %2 : vector<8x1xi1>, vector<8x1xf32>
    %24 = arith.subf %10, %20 : vector<8x1xf32>
    %cst_7 = arith.constant 0xFF800000 : f32
    %25 = vector.broadcast %cst_7 : f32 to vector<8x32xf32>
    %26 = arith.select %16, %25, %12 : vector<8x32xi1>, vector<8x32xf32>
    %cst_8 = arith.constant dense<0xFF800000> : vector<8xf32>
    %27 = vector.multi_reduction <maximumf>, %26, %cst_8 [1] : vector<8x32xf32> to vector<8xf32>
    %28 = vector.shape_cast %27 : vector<8xf32> to vector<8x1xf32>
    %29 = vector.broadcast %28 : vector<8x1xf32> to vector<8x32xf32>
    %30 = arith.cmpf oge, %26, %29 : vector<8x32xf32>
    %31 = arith.extui %30 : vector<8x32xi1> to vector<8x32xi32>
    %32 = arith.sitofp %31 : vector<8x32xi32> to vector<8x32xf32>
    %cst_9 = arith.constant dense<0.000000e+00> : vector<8xf32>
    %33 = vector.multi_reduction <add>, %32, %cst_9 [1] : vector<8x32xf32> to vector<8xf32>
    %34 = vector.shape_cast %33 : vector<8xf32> to vector<8x1xf32>
    %cst_10 = arith.constant 0.000000e+00 : f32
    %35 = vector.broadcast %cst_10 : f32 to vector<8x1xf32>
    %36 = arith.cmpf ogt, %24, %35 : vector<8x1xf32>
    %37 = arith.select %36, %28, %23 : vector<8x1xi1>, vector<8x1xf32>
    %38 = arith.subf %24, %34 : vector<8x1xf32>
    %cst_11 = arith.constant 0xFF800000 : f32
    %39 = vector.broadcast %cst_11 : f32 to vector<8x32xf32>
    %40 = arith.select %30, %39, %26 : vector<8x32xi1>, vector<8x32xf32>
    %cst_12 = arith.constant dense<0xFF800000> : vector<8xf32>
    %41 = vector.multi_reduction <maximumf>, %40, %cst_12 [1] : vector<8x32xf32> to vector<8xf32>
    %42 = vector.shape_cast %41 : vector<8xf32> to vector<8x1xf32>
    %cst_13 = arith.constant 0.000000e+00 : f32
    %43 = vector.broadcast %cst_13 : f32 to vector<8x1xf32>
    %44 = arith.cmpf ogt, %38, %43 : vector<8x1xf32>
    %45 = arith.select %44, %42, %37 : vector<8x1xi1>, vector<8x1xf32>
    %cst_14 = arith.constant 0.000000e+00 : f32
    %46 = vector.broadcast %cst_14 : f32 to vector<8x32xf32>
    %47 = arith.maximumf %0, %46 : vector<8x32xf32>
    %48 = vector.broadcast %45 : vector<8x1xf32> to vector<8x32xf32>
    %49 = arith.cmpf oge, %0, %48 : vector<8x32xf32>
    %cst_15 = arith.constant 0.000000e+00 : f32
    %50 = vector.broadcast %cst_15 : f32 to vector<8x32xf32>
    %51 = arith.select %49, %47, %50 : vector<8x32xi1>, vector<8x32xf32>
    %c0_16 = arith.constant 0 : index
    %c0_17 = arith.constant 0 : index
    %52 = vector.load %arg2[%c0_16, %c0_17] : memref<8x32xf32, #tpu.memory_space<vmem>>, vector<8x32xf32>
    tpu.vector_store %arg2[%c0_16, %c0_17], %51 {strides = array<i32>} : memref<8x32xf32, #tpu.memory_space<vmem>>, vector<8x32xf32>,
    return
  }
  func.func @transform_0(%arg0: i32) -> (i32, i32) {
    %c0_i32 = arith.constant 0 : i32
    %c0_i32_0 = arith.constant 0 : i32
    return %arg0, %c0_i32 : i32, i32
  }
  func.func @transform_1(%arg0: i32) -> (i32, i32) {
    %c0_i32 = arith.constant 0 : i32
    %c0_i32_0 = arith.constant 0 : i32
    return %arg0, %c0_i32 : i32, i32
  }
}

</mosaic_0001>

<llo_original>
// kernel: tpu_custom_call.1
$region0: #{tpu_custom_call.1}
  #allocation0 [shape = 'u32[]', space=smem, size = 0x4, offset = 0x4, fixed_abs, tag = 'smem constant byte address 0x4 - core index']
  #allocation1 [shape = 'u32[144,128]{1,0:T(1,128)}', space=vmem, size = 0x12000, scoped, tag = 'internal scratch']
  %s0 = inlined_call_operand.hbm [shape: f32[8,32], index: 0, kind: input, shape index: {}]
  %s1 = inlined_call_operand.hbm [shape: f32[8,32], index: 1, kind: output, shape index: {}]
  %s2 = sld [smem:[#allocation0]]
  $region18: #{tpu_custom_call.1} parent=0
    _
  %s4 = ssub.s32 1, %s2
  %s5 = scalar_select 0, %s4, %s2
  $region1: #{tpu_custom_call.1} parent=0
    #allocation2 [shape = 'u8[4096]{0}', space=vmem, size = 0x1000, scoped, tag = 'input window, operand 0, single buffered']
    #allocation3 [shape = 's32[1]{0}', space=sflag, size = 0x4, scoped, tag = 'scoped memory for tpu_custom_call.1']
    #allocation4 [shape = 's32[1]{0}', space=sflag, size = 0x4, scoped, tag = 'scoped memory for tpu_custom_call.1']
    #allocation5 [shape = 'u8[4096]{0}', space=vmem, size = 0x1000, scoped, tag = 'output window, operand 0, single buffered']
    %6 = vsyncpa [#allocation3], 0
    %7 = vsyncpa [#allocation4], 0
    // Predicated region
    $region2: #{tpu_custom_call.1} parent=1 // pred_check
      _
    $region3: #{tpu_custom_call.1} parent=1 // pred_check_branch
      %9 = sbr.rel (0) target = $region5
    $region4: #{tpu_custom_call.1} parent=1 // pred_region
      %s11 = ssub.s32 128, 128
      %12 = vsyncadd [#allocation3], %s11
      %s14 = sshll.u32 [#allocation2], 4
      %s15 = int_to_ptr.vmem [resolvable:$true] %s14
      %17 = dma.hbm_to_vmem [thread:$0]  %s0, 128, %s15, [#allocation3]
    $region5: #{tpu_custom_call.1} parent=1 // pred_fallthru
      _
    // Predicated region
    $region6: #{tpu_custom_call.1} parent=1 // pred_check
      _
    $region7: #{tpu_custom_call.1} parent=1 // pred_check_branch
      %19 = sbr.rel (0) target = $region9
    $region8: #{tpu_custom_call.1} parent=1 // pred_region
      %20 = dma.done [#allocation3], 128
    $region9: #{tpu_custom_call.1} parent=1 // pred_fallthru
      _
    %v21 = vld [vmem:[#allocation2] sm:$0xff]
    %vm22 = vcmask 261120
    %v23 = vsel %vm22, %v21, -inf
    %24 = vmax.xlane.f32.xlu0 %v23
    %v25 = vpop.xlane.xlu0 %24
    %vm26 = vcmp.ge.f32.partialorder %v21, %v25
    %v27 = vsel %vm26, 1, 0
    %v28 = vcvt.s32.f32 %v27
    %v29 = vsel %vm22, %v28, 0.0
    %30 = vadd.xlane.f32.xlu0 %v29
    %v31 = vpop.xlane.xlu0 %30
    %v32 = vsub.f32 4.0, %v31
    %v33 = vsel %vm26, -inf, %v21
    %v34 = vsel %vm22, %v33, -inf
    %35 = vmax.xlane.f32.xlu0 %v34
    %v36 = vpop.xlane.xlu0 %35
    %vm37 = vcmp.ge.f32.partialorder %v33, %v36
    %v38 = vsel %vm37, 1, 0
    %v39 = vcvt.s32.f32 %v38
    %v40 = vsel %vm22, %v39, 0.0
    %41 = vadd.xlane.f32.xlu0 %v40
    %v42 = vpop.xlane.xlu0 %41
    %vm43 = vcmp.gt.f32.partialorder %v32, 0.0
    %v44 = vsel %vm43, %v36, %v25
    %v45 = vsub.f32 %v32, %v42
    %v46 = vsel %vm37, -inf, %v33
    %v47 = vsel %vm22, %v46, -inf
    %48 = vmax.xlane.f32.xlu0 %v47
    %v49 = vpop.xlane.xlu0 %48
    %vm50 = vcmp.ge.f32.partialorder %v46, %v49
    %v51 = vsel %vm50, 1, 0
    %v52 = vcvt.s32.f32 %v51
    %v53 = vsel %vm22, %v52, 0.0
    %54 = vadd.xlane.f32.xlu0 %v53
    %v55 = vpop.xlane.xlu0 %54
    %vm56 = vcmp.gt.f32.partialorder %v45, 0.0
    %v57 = vsel %vm56, %v49, %v44
    %v58 = vsub.f32 %v45, %v55
    %v59 = vsel %vm50, -inf, %v46
    %v60 = vsel %vm22, %v59, -inf
    %61 = vmax.xlane.f32.xlu0 %v60
    %v62 = vpop.xlane.xlu0 %61
    %vm63 = vcmp.gt.f32.partialorder %v58, 0.0
    %v64 = vsel %vm63, %v62, %v57
    %v65 = vmax.f32 %v21, 0.0
    %vm66 = vcmp.ge.f32.partialorder %v21, %v64
    %v67 = vsel %vm66, %v65, 0.0
    %68 = vst.msk [vmem:[#allocation5] sm:$0xff] %vm22, %v67
    // Predicated region
    $region10: #{tpu_custom_call.1} parent=1 // pred_check
      _
    $region11: #{tpu_custom_call.1} parent=1 // pred_check_branch
      %70 = sbr.rel (0) target = $region13
    $region12: #{tpu_custom_call.1} parent=1 // pred_region
      %s72 = ssub.s32 128, 128
      %73 = vsyncadd [#allocation4], %s72
      %s75 = sshll.u32 [#allocation5], 4
      %s76 = int_to_ptr.vmem [resolvable:$true] %s75
      %78 = dma.vmem_to_hbm [thread:$0]  %s76, 128, %s1, [#allocation4]
    $region13: #{tpu_custom_call.1} parent=1 // pred_fallthru
      _
    // Predicated region
    $region14: #{tpu_custom_call.1} parent=1 // pred_check
      _
    $region15: #{tpu_custom_call.1} parent=1 // pred_check_branch
      %80 = sbr.rel (0) target = $region17
    $region16: #{tpu_custom_call.1} parent=1 // pred_region
      %81 = dma.done [#allocation4], 128
    $region17: #{tpu_custom_call.1} parent=1 // pred_fallthru
      _
    %82 = vsyncpa [#allocation3], 1
    %83 = vsyncpa [#allocation4], 1

</llo_original>
